<compile_context>
chip_gen: v7x
topology: tpu7x:2x2x1
jax: 0.10.0
libtpu: 0.0.40
codegen_flags: <defaults>
</compile_context>

<pallas_src>
import functools

import jax
import jax.numpy as jnp
from jax.experimental import pallas as pl
from jax.experimental.pallas import tpu as pltpu

HIDDEN = 256  # fixed by the module (fc1 out_features)


def _round_up(n, m):
    return ((n + m - 1) // m) * m


def _choose_tile_m(batch, block_m):
    """Batch tile: multiple of 16; >=2 grid steps for mid-size batches (v7x 2x TC)."""
    block_m = max(16, (block_m // 16) * 16)
    if batch <= 64:
        tm = _round_up(max(batch, 1), 16)
    else:
        tm = _round_up(-(-batch // 2), 16)   # aim for at least 2 grid steps
    return min(block_m, tm)


def rule_policy_kernel(x_ref, w1_ref, w2_ref, bias_ref, o_ref):
    # x: (TM, D) f32, w1: (D, H), w2: (H, A_pad), bias: (1, H + A_pad) f32,
    # o: (TM, A_pad).  Weight dtype decides the MXU operand precision.
    hdim = w1_ref.shape[1]
    cdt = w1_ref.dtype
    full_precision = jnp.dtype(cdt) == jnp.dtype(jnp.float32)
    prec = jax.lax.Precision.HIGHEST if full_precision else jax.lax.Precision.DEFAULT

    x = x_ref[...].astype(cdt)                # cast hidden behind the DMA pipeline
    h = jnp.dot(x, w1_ref[...],
                preferred_element_type=jnp.float32, precision=prec)
    h = jnp.maximum(h + bias_ref[:, :hdim], 0.0)   # f32 bias + ReLU (v5e-safe VPU path)
    out = jnp.dot(h.astype(cdt), w2_ref[...],
                  preferred_element_type=jnp.float32, precision=prec)
    out = out + bias_ref[:, hdim:]
    o_ref[...] = out.astype(o_ref.dtype)      # lane-dense (TM, 128k) store


def prepare_params(w1, b1, w2, b2, *, compute_dtype=jnp.bfloat16):
    """One-time pad/cast of the static weights (do NOT redo this per forward call).

    w1: (D, H); b1: (1, H) or (H,); w2: (H, A); b2: (1, A) or (A,).
    Returns a dict consumed by rule_policy_forward.
    """
    D, H = w1.shape
    H2, A = w2.shape
    assert H == H2
    a_pad = _round_up(A, 128)                 # lane-dense logits
    w1_c = w1.astype(compute_dtype)           # contraction dim kept at natural D
    w2_p = jnp.zeros((H, a_pad), compute_dtype).at[:, :A].set(w2.astype(compute_dtype))
    bias = jnp.zeros((1, H + a_pad), jnp.float32)
    bias = bias.at[:, :H].set(jnp.reshape(b1, (1, H)).astype(jnp.float32))
    bias = bias.at[:, H:H + A].set(jnp.reshape(b2, (1, A)).astype(jnp.float32))
    return {"w1": w1_c, "w2": w2_p, "bias": bias, "action_dim": A}


@functools.partial(
    jax.jit,
    static_argnames=("action_dim", "block_m", "out_dtype", "return_padded"))
def _forward_impl(x, w1, w2, bias, *, action_dim, block_m, out_dtype, return_padded):
    B, D = x.shape
    H = w1.shape[1]
    a_pad = w2.shape[1]

    tm = _choose_tile_m(B, block_m)
    b_pad = _round_up(B, tm)
    # Only the batch rows are padded (cheap / often a no-op); x stays f32, the
    # bf16 cast happens inside the kernel.
    x_p = x if b_pad == B else jnp.zeros((b_pad, D), x.dtype).at[:B, :].set(x)

    itemsize = lambda a: jnp.dtype(a.dtype).itemsize
    bytes_accessed = (x_p.size * itemsize(x_p)
                      + w1.size * itemsize(w1) + w2.size * itemsize(w2)
                      + bias.size * itemsize(bias)
                      + b_pad * a_pad * jnp.dtype(out_dtype).itemsize)
    flops = 2 * b_pad * (D * H + H * a_pad)

    out_padded = pl.pallas_call(
        rule_policy_kernel,
        out_shape=jax.ShapeDtypeStruct((b_pad, a_pad), out_dtype),
        grid=(b_pad // tm,),
        in_specs=[
            pl.BlockSpec((tm, D), lambda i: (i, 0)),         # stream batch tiles
            pl.BlockSpec((D, H), lambda i: (0, 0)),          # weights VMEM-resident
            pl.BlockSpec((H, a_pad), lambda i: (0, 0)),
            pl.BlockSpec((1, H + a_pad), lambda i: (0, 0)),  # fused [b1 | b2]
        ],
        out_specs=pl.BlockSpec((tm, a_pad), lambda i: (i, 0)),
        compiler_params=pltpu.CompilerParams(
            dimension_semantics=("parallel",)),              # shards across v7x TCs
        cost_estimate=pl.CostEstimate(
            flops=flops, transcendentals=0, bytes_accessed=bytes_accessed),
    )(x_p, w1, w2, bias)

    if return_padded:
        return out_padded                     # (b_pad, a_pad): slice lazily downstream
    return out_padded[:B, :action_dim]


def rule_policy_forward(x, params, *, block_m=4096, out_dtype=jnp.float32,
                        return_padded=False):
    """x: (B, D) f32; params from prepare_params. Returns (B, A) logits."""
    return _forward_impl(x, params["w1"], params["w2"], params["bias"],
                         action_dim=params["action_dim"], block_m=block_m,
                         out_dtype=out_dtype, return_padded=return_padded)


def init_params(key, support_context_dim, hidden, action_space_size):
    """Deterministic synthetic init (PyTorch-Linear-style uniform fan-in bounds)."""
    k1, k2, k3, k4 = jax.random.split(key, 4)
    bound1 = 1.0 / jnp.sqrt(support_context_dim)
    bound2 = 1.0 / jnp.sqrt(hidden)
    w1 = jax.random.uniform(k1, (support_context_dim, hidden), jnp.float32,
                            -bound1, bound1)
    b1 = jax.random.uniform(k2, (1, hidden), jnp.float32, -bound1, bound1)
    w2 = jax.random.uniform(k3, (hidden, action_space_size), jnp.float32,
                            -bound2, bound2)
    b2 = jax.random.uniform(k4, (1, action_space_size), jnp.float32,
                            -bound2, bound2)
    return w1, b1, w2, b2


if __name__ == "__main__":
    # Shapes consistent with the module: Batch=2, context dim=32,
    # hidden=256 (fixed by the module), action space=16.
    B, D_CTX, A = 2, 32, 16

    key = jax.random.PRNGKey(0)
    kx, kp = jax.random.split(key)
    x = jax.random.normal(kx, (B, D_CTX), dtype=jnp.float32)
    w1, b1, w2, b2 = init_params(kp, D_CTX, HIDDEN, A)

    # Default path: bf16 matmul operands, f32 accumulation / bias / ReLU / logits.
    params_bf16 = prepare_params(w1, b1, w2, b2, compute_dtype=jnp.bfloat16)
    logits = rule_policy_forward(x, params_bf16)
    logits = jax.block_until_ready(logits)
    assert logits.shape == (B, A)
    assert logits.dtype == jnp.float32

    # Reference built with the same operand precision as the kernel.
    bf = jnp.bfloat16
    h_ref = jnp.dot(x.astype(bf), w1.astype(bf),
                    preferred_element_type=jnp.float32) + b1
    h_ref = jnp.maximum(h_ref, 0.0)
    ref_bf = jnp.dot(h_ref.astype(bf), w2.astype(bf),
                     preferred_element_type=jnp.float32) + b2
    assert jnp.allclose(logits, ref_bf, atol=1e-3, rtol=1e-3)

    # Full-precision path (Precision.HIGHEST inside the kernel) vs f32 reference.
    params_f32 = prepare_params(w1, b1, w2, b2, compute_dtype=jnp.float32)
    logits_f32 = rule_policy_forward(x, params_f32)
    logits_f32 = jax.block_until_ready(logits_f32)
    hp = jax.lax.Precision.HIGHEST
    ref_f32 = (jnp.maximum(jnp.dot(x, w1, precision=hp) + b1, 0.0) @ w2)  # noqa: E501
    ref_f32 = jnp.dot(jnp.maximum(jnp.dot(x, w1, precision=hp) + b1, 0.0), w2,
                      precision=hp) + b2
    assert jnp.allclose(logits_f32, ref_f32, atol=1e-4, rtol=1e-4)

    print("KERNEL_OK")
</pallas_src>

<mosaic_0001>
module attributes {stable_mosaic.version = 11 : i64} {
  func.func @rule_policy_kernel(%arg0: i32, %arg1: memref<16x32xf32, #tpu.memory_space<vmem>>, %arg2: memref<32x256xbf16, #tpu.memory_space<vmem>>, %arg3: memref<256x128xbf16, #tpu.memory_space<vmem>>, %arg4: memref<1x384xf32, #tpu.memory_space<vmem>>, %arg5: memref<16x128xf32, #tpu.memory_space<vmem>>) attributes {dimension_semantics = [#tpu.dimension_semantics<parallel>], iteration_bounds = array<i64: 1>, scalar_prefetch = 0 : i64, scratch_operands = 0 : i64, tpu.core_type = #tpu.core_type<tc>, window_params = [{transform_indices = @transform_0, window_bounds = array<i64: 16, 32>}, {pipeline_mode = #tpu.pipeline_mode<synchronous>, transform_indices = @transform_1, window_bounds = array<i64: 32, 256>}, {pipeline_mode = #tpu.pipeline_mode<synchronous>, transform_indices = @transform_2, window_bounds = array<i64: 256, 128>}, {pipeline_mode = #tpu.pipeline_mode<synchronous>, transform_indices = @transform_3, window_bounds = array<i64: 1, 384>}, {transform_indices = @transform_4, window_bounds = array<i64: 16, 128>}]} {
    %c0 = arith.constant 0 : index
    %c0_0 = arith.constant 0 : index
    %0 = vector.load %arg1[%c0, %c0_0] : memref<16x32xf32, #tpu.memory_space<vmem>>, vector<16x32xf32>
    %1 = arith.truncf %0 : vector<16x32xf32> to vector<16x32xbf16>
    %c0_1 = arith.constant 0 : index
    %c0_2 = arith.constant 0 : index
    %2 = vector.load %arg2[%c0_1, %c0_2] : memref<32x256xbf16, #tpu.memory_space<vmem>>, vector<32x256xbf16>
    %cst = arith.constant dense<0.000000e+00> : vector<16x256xf32>
    %3 = tpu.matmul %1, %2, %cst {dimension_numbers = #tpu.dot_dimension_numbers<[1], [0], [0], [1], [0, 0, 1, 1], [], []>} : vector<16x32xbf16>, vector<32x256xbf16>, vector<16x256xf32> -> vector<16x256xf32>
    %c0_3 = arith.constant 0 : index
    %c0_4 = arith.constant 0 : index
    %4 = vector.load %arg4[%c0_3, %c0_4] : memref<1x384xf32, #tpu.memory_space<vmem>>, vector<1x256xf32>
    %5 = vector.broadcast %4 : vector<1x256xf32> to vector<16x256xf32>
    %6 = arith.addf %3, %5 : vector<16x256xf32>
    %cst_5 = arith.constant 0.000000e+00 : f32
    %7 = vector.broadcast %cst_5 : f32 to vector<16x256xf32>
    %8 = arith.maximumf %6, %7 : vector<16x256xf32>
    %9 = arith.truncf %8 : vector<16x256xf32> to vector<16x256xbf16>
    %c0_6 = arith.constant 0 : index
    %c0_7 = arith.constant 0 : index
    %10 = vector.load %arg3[%c0_6, %c0_7] : memref<256x128xbf16, #tpu.memory_space<vmem>>, vector<256x128xbf16>
    %cst_8 = arith.constant dense<0.000000e+00> : vector<16x128xf32>
    %11 = tpu.matmul %9, %10, %cst_8 {dimension_numbers = #tpu.dot_dimension_numbers<[1], [0], [0], [1], [0, 0, 1, 1], [], []>} : vector<16x256xbf16>, vector<256x128xbf16>, vector<16x128xf32> -> vector<16x128xf32>
    %c0_9 = arith.constant 0 : index
    %c256 = arith.constant 256 : index
    %12 = vector.load %arg4[%c0_9, %c256] : memref<1x384xf32, #tpu.memory_space<vmem>>, vector<1x128xf32>
    %13 = vector.broadcast %12 : vector<1x128xf32> to vector<16x128xf32>
    %14 = arith.addf %11, %13 : vector<16x128xf32>
    %c0_10 = arith.constant 0 : index
    %c0_11 = arith.constant 0 : index
    %15 = vector.load %arg5[%c0_10, %c0_11] : memref<16x128xf32, #tpu.memory_space<vmem>>, vector<16x128xf32>
    tpu.vector_store %arg5[%c0_10, %c0_11], %14 {strides = array<i32>} : memref<16x128xf32, #tpu.memory_space<vmem>>, vector<16x128xf32>,
    return
  }
  func.func @transform_0(%arg0: i32) -> (i32, i32) {
    %c0_i32 = arith.constant 0 : i32
    %c0_i32_0 = arith.constant 0 : i32
    return %arg0, %c0_i32 : i32, i32
  }
  func.func @transform_1(%arg0: i32) -> (i32, i32) {
    %c0_i32 = arith.constant 0 : i32
    %c0_i32_0 = arith.constant 0 : i32
    %c0_i32_1 = arith.constant 0 : i32
    return %c0_i32, %c0_i32_0 : i32, i32
  }
  func.func @transform_2(%arg0: i32) -> (i32, i32) {
    %c0_i32 = arith.constant 0 : i32
    %c0_i32_0 = arith.constant 0 : i32
    %c0_i32_1 = arith.constant 0 : i32
    return %c0_i32, %c0_i32_0 : i32, i32
  }
  func.func @transform_3(%arg0: i32) -> (i32, i32) {
    %c0_i32 = arith.constant 0 : i32
    %c0_i32_0 = arith.constant 0 : i32
    %c0_i32_1 = arith.constant 0 : i32
    return %c0_i32, %c0_i32_0 : i32, i32
  }
  func.func @transform_4(%arg0: i32) -> (i32, i32) {
    %c0_i32 = arith.constant 0 : i32
    %c0_i32_0 = arith.constant 0 : i32
    return %arg0, %c0_i32 : i32, i32
  }
}

</mosaic_0001>

<llo_original>
// kernel: _forward_impl.1
$region0: #{_forward_impl.1}
  #allocation0 [shape = 'u32[]', space=smem, size = 0x4, offset = 0x4, fixed_abs, tag = 'smem constant byte address 0x4 - core index']
  #allocation1 [shape = 'u32[144,128]{1,0:T(1,128)}', space=vmem, size = 0x12000, scoped, tag = 'internal scratch']
  %s0 = inlined_call_operand.vmem [shape: f32[16,32], index: 0, kind: input, shape index: {}]
  %s1 = inlined_call_operand.hbm [shape: bf16[32,256], index: 1, kind: input, shape index: {}]
  %s2 = inlined_call_operand.hbm [shape: bf16[256,128], index: 2, kind: input, shape index: {}]
  %s3 = inlined_call_operand.vmem [shape: f32[1,384], index: 3, kind: input, shape index: {}]
  %s4 = inlined_call_operand.vmem [shape: f32[16,128], index: 4, kind: output, shape index: {}]
  %s5 = sld [smem:[#allocation0]]
  $region34: #{_forward_impl.1} parent=0
    _
  %s7 = ssub.s32 1, %s5
  %s8 = scalar_select 0, %s7, %s5
  $region1: #{_forward_impl.1} parent=0
    #allocation2 [shape = 'u8[16384]{0}', space=vmem, size = 0x4000, scoped, tag = 'input window, operand 1, single buffered']
    #allocation3 [shape = 's32[1]{0}', space=sflag, size = 0x4, scoped, tag = 'scoped memory for _forward_impl.1']
    #allocation4 [shape = 'u8[65536]{0}', space=vmem, size = 0x10000, scoped, tag = 'input window, operand 2, single buffered']
    #allocation5 [shape = 's32[1]{0}', space=sflag, size = 0x4, scoped, tag = 'scoped memory for _forward_impl.1']
    %9 = vsyncpa [#allocation3], 0
    %10 = vsyncpa [#allocation5], 0
    // Predicated region
    $region2: #{_forward_impl.1} parent=1 // pred_check
      _
    $region3: #{_forward_impl.1} parent=1 // pred_check_branch
      %12 = sbr.rel (0) target = $region5
    $region4: #{_forward_impl.1} parent=1 // pred_region
      _
    $region5: #{_forward_impl.1} parent=1 // pred_fallthru
      _
    // Predicated region
    $region6: #{_forward_impl.1} parent=1 // pred_check
      _
    $region7: #{_forward_impl.1} parent=1 // pred_check_branch
      %14 = sbr.rel (0) target = $region9
    $region8: #{_forward_impl.1} parent=1 // pred_region
      %s16 = ssub.s32 512, 512
      %17 = vsyncadd [#allocation3], %s16
      %s18 = sshll.u32 [#allocation2], 4
      %s19 = int_to_ptr.vmem [resolvable:$true] %s18
      %24 = dma.hbm_to_vmem [thread:$0]  %s1, 512, %s19, [#allocation3], 128, 128, 8
    $region9: #{_forward_impl.1} parent=1 // pred_fallthru
      _
    // Predicated region
    $region10: #{_forward_impl.1} parent=1 // pred_check
      _
    $region11: #{_forward_impl.1} parent=1 // pred_check_branch
      %26 = sbr.rel (0) target = $region13
    $region12: #{_forward_impl.1} parent=1 // pred_region
      %s28 = ssub.s32 2048, 2048
      %29 = vsyncadd [#allocation5], %s28
      %s30 = sshll.u32 [#allocation4], 4
      %s31 = int_to_ptr.vmem [resolvable:$true] %s30
      %36 = dma.hbm_to_vmem [thread:$0]  %s2, 2048, %s31, [#allocation5], 64, 64, 4
    $region13: #{_forward_impl.1} parent=1 // pred_fallthru
      _
    // Predicated region
    $region14: #{_forward_impl.1} parent=1 // pred_check
      _
    $region15: #{_forward_impl.1} parent=1 // pred_check_branch
      %38 = sbr.rel (0) target = $region17
    $region16: #{_forward_impl.1} parent=1 // pred_region
      _
    $region17: #{_forward_impl.1} parent=1 // pred_fallthru
      _
    // Predicated region
    $region18: #{_forward_impl.1} parent=1 // pred_check
      _
    $region19: #{_forward_impl.1} parent=1 // pred_check_branch
      %40 = sbr.rel (0) target = $region21
    $region20: #{_forward_impl.1} parent=1 // pred_region
      %41 = dma.done [#allocation3], 512
    $region21: #{_forward_impl.1} parent=1 // pred_fallthru
      _
    // Predicated region
    $region22: #{_forward_impl.1} parent=1 // pred_check
      _
    $region23: #{_forward_impl.1} parent=1 // pred_check_branch
      %43 = sbr.rel (0) target = $region25
    $region24: #{_forward_impl.1} parent=1 // pred_region
      %44 = dma.done [#allocation5], 2048
    $region25: #{_forward_impl.1} parent=1 // pred_fallthru
      _
    %v46 = vld [vmem:[%s0] sm:$0xff]
    %v47 = vld [vmem:[%s0 + $0x8] sm:$0xff]
    %v48 = vpack.c.bf16 %v47, %v46
    %v49 = vld [vmem:[#allocation2] sm:$0xff]
    %v50 = vld [vmem:[#allocation2 + $0x8] sm:$0xff]
    %v51 = vld [vmem:[#allocation2 + $0x10] sm:$0xff]
    %v52 = vld [vmem:[#allocation2 + $0x18] sm:$0xff]
    %v53 = vld [vmem:[%s3] sm:$0x3]
    %v55 = vlaneseq
    %v56 = vshrl.u32 %v55, 7
    %v57 = vsub.s32 0, %v56
    %v58 = vrot.slane %v53, %v57
    %v59 = vlaneseq
    %v60 = vshrl.u32 %v59, 7
    %v61 = vsub.s32 1, %v60
    %v62 = vrot.slane %v53, %v61
    %v69 = vunpack.c.l.b16 %v49
    %v70 = vunpack.c.h.b16 %v49
    %v71 = vunpack.c.l.b16 %v50
    %v72 = vunpack.c.h.b16 %v50
    %v73 = vunpack.c.l.b16 %v51
    %v74 = vunpack.c.h.b16 %v51
    %v75 = vunpack.c.l.b16 %v52
    %v76 = vunpack.c.h.b16 %v52
    %v77 = vpack.c.b16 %v71, %v69
    %v78 = vpack.c.b16 %v72, %v70
    %v79 = vpack.c.b16 %v75, %v73
    %v80 = vpack.c.b16 %v76, %v74
    %vm85 = vcmask 261120
    %v87 = vsel %vm85, %v48, 0
    %89 = vmatprep.subr.bf16.mxu0 %v78
    %90 = vmatpush1.bf16.msra.mxu0 %v77
    %91 = vmatprep.subr.bf16.mxu0 %v80
    %92 = vmatpush1.bf16.msra.mxu0 %v79
    %93 = vmatprep.subr.bf16.mxu0 0
    %94 = vmatpush1.bf16.msra.mxu0 0
    %95 = vmatprep.subr.bf16.mxu0 0
    %96 = vmatpush1.bf16.msra.mxu0 0
    %97 = vmatprep.subr.bf16.mxu0 0
    %98 = vmatpush1.bf16.msra.mxu0 0
    %99 = vmatprep.subr.bf16.mxu0 0
    %100 = vmatpush1.bf16.msra.mxu0 0
    %101 = vmatprep.subr.bf16.mxu0 0
    %102 = vmatpush1.bf16.msra.mxu0 0
    %103 = vmatprep.subr.bf16.mxu0 0
    %104 = vmatpush1.bf16.msra.mxu0 0
    %105 = vmatprep.subr.bf16.mxu0 0
    %106 = vmatpush1.bf16.msra.mxu0 0
    %107 = vmatprep.subr.bf16.mxu0 0
    %108 = vmatpush1.bf16.msra.mxu0 0
    %109 = vmatprep.subr.bf16.mxu0 0
    %110 = vmatpush1.bf16.msra.mxu0 0
    %111 = vmatprep.subr.bf16.mxu0 0
    %112 = vmatpush1.bf16.msra.mxu0 0
    %113 = vmatprep.subr.bf16.mxu0 0
    %114 = vmatpush1.bf16.msra.mxu0 0
    %115 = vmatprep.subr.bf16.mxu0 0
    %116 = vmatpush1.bf16.msra.mxu0 0
    %117 = vmatprep.subr.bf16.mxu0 0
    %118 = vmatpush1.bf16.msra.mxu0 0
    %119 = vmatprep.subr.bf16.mxu0 0
    %120 = vmatpush1.bf16.msra.mxu0 0
    %121 = vmatprep.mubr.bf16.mxu0 0
    %122 = vmatmul.mubr.bf16.gmra.mrb[0].mxu0 %v87
    %v123 = vpop.f32.mrb[0].mxu0
    %v124 = vadd.f32 %v58, %v123
    %v125 = vpop.f32.mrb[0].mxu0
    %v126 = vadd.f32 %v62, %v125
    %v127 = vpop.f32.mrb[0].mxu0
    %v128 = vadd.f32 %v58, %v127
    %v129 = vpop.f32.mrb[0].mxu0
    %v130 = vadd.f32 %v62, %v129
    %131 = vdwg.mxu0
    %v132 = vmax.f32 %v124, 0.0
    %v133 = vmax.f32 %v126, 0.0
    %v134 = vmax.f32 %v128, 0.0
    %v135 = vmax.f32 %v130, 0.0
    %v136 = vpack.c.bf16 %v134, %v132
    %v137 = vpack.c.bf16 %v135, %v133
    %v138 = vld [vmem:[#allocation4] sm:$0xf]
    %v139 = vld [vmem:[#allocation4 + $0x4] sm:$0xf]
    %v140 = vld [vmem:[#allocation4 + $0x8] sm:$0xf]
    %v141 = vld [vmem:[#allocation4 + $0xc] sm:$0xf]
    %v142 = vld [vmem:[#allocation4 + $0x10] sm:$0xf]
    %v143 = vld [vmem:[#allocation4 + $0x14] sm:$0xf]
    %v144 = vld [vmem:[#allocation4 + $0x18] sm:$0xf]
    %v145 = vld [vmem:[#allocation4 + $0x1c] sm:$0xf]
    %v146 = vld [vmem:[#allocation4 + $0x20] sm:$0xf]
    %v147 = vld [vmem:[#allocation4 + $0x24] sm:$0xf]
    %v148 = vld [vmem:[#allocation4 + $0x28] sm:$0xf]
    %v149 = vld [vmem:[#allocation4 + $0x2c] sm:$0xf]
    %v150 = vld [vmem:[#allocation4 + $0x30] sm:$0xf]
    %v151 = vld [vmem:[#allocation4 + $0x34] sm:$0xf]
    %v152 = vld [vmem:[#allocation4 + $0x38] sm:$0xf]
    %v153 = vld [vmem:[#allocation4 + $0x3c] sm:$0xf]
    %v154 = vld [vmem:[#allocation4 + $0x40] sm:$0xf]
    %v155 = vld [vmem:[#allocation4 + $0x44] sm:$0xf]
    %v156 = vld [vmem:[#allocation4 + $0x48] sm:$0xf]
    %v157 = vld [vmem:[#allocation4 + $0x4c] sm:$0xf]
    %v158 = vld [vmem:[#allocation4 + $0x50] sm:$0xf]
    %v159 = vld [vmem:[#allocation4 + $0x54] sm:$0xf]
    %v160 = vld [vmem:[#allocation4 + $0x58] sm:$0xf]
    %v161 = vld [vmem:[#allocation4 + $0x5c] sm:$0xf]
    %v162 = vld [vmem:[#allocation4 + $0x60] sm:$0xf]
    %v163 = vld [vmem:[#allocation4 + $0x64] sm:$0xf]
    %v164 = vld [vmem:[#allocation4 + $0x68] sm:$0xf]
    %v165 = vld [vmem:[#allocation4 + $0x6c] sm:$0xf]
    %v166 = vld [vmem:[#allocation4 + $0x70] sm:$0xf]
    %v167 = vld [vmem:[#allocation4 + $0x74] sm:$0xf]
    %v168 = vld [vmem:[#allocation4 + $0x78] sm:$0xf]
    %v169 = vld [vmem:[#allocation4 + $0x7c] sm:$0xf]
    %v170 = vld [vmem:[%s3 + $0x2] sm:$0x1]
    %v172 = vlaneseq
    %v173 = vshrl.u32 %v172, 7
    %v174 = vsub.s32 0, %v173
    %v175 = vrot.slane %v170, %v174
    %v209 = vunpack.c.l.b16 %v138
    %v210 = vunpack.c.l.b16 %v139
    %v211 = vunpack.c.l.b16 %v140
    %v212 = vunpack.c.l.b16 %v141
    %v213 = vunpack.c.l.b16 %v142
    %v214 = vunpack.c.l.b16 %v143
    %v215 = vunpack.c.l.b16 %v144
    %v216 = vunpack.c.l.b16 %v145
    %v217 = vunpack.c.l.b16 %v146
    %v218 = vunpack.c.l.b16 %v147
    %v219 = vunpack.c.l.b16 %v148
    %v220 = vunpack.c.l.b16 %v149
    %v221 = vunpack.c.l.b16 %v150
    %v222 = vunpack.c.l.b16 %v151
    %v223 = vunpack.c.l.b16 %v152
    %v224 = vunpack.c.l.b16 %v153
    %v225 = vunpack.c.l.b16 %v154
    %v226 = vunpack.c.l.b16 %v155
    %v227 = vunpack.c.l.b16 %v156
    %v228 = vunpack.c.l.b16 %v157
    %v229 = vunpack.c.l.b16 %v158
    %v230 = vunpack.c.l.b16 %v159
    %v231 = vunpack.c.l.b16 %v160
    %v232 = vunpack.c.l.b16 %v161
    %v233 = vunpack.c.l.b16 %v162
    %v234 = vunpack.c.l.b16 %v163
    %v235 = vunpack.c.l.b16 %v164
    %v236 = vunpack.c.l.b16 %v165
    %v237 = vunpack.c.l.b16 %v166
    %v238 = vunpack.c.l.b16 %v167
    %v239 = vunpack.c.l.b16 %v168
    %v240 = vunpack.c.l.b16 %v169
    %v241 = vpack.c.b16 %v210, %v209
    %v242 = vpack.c.b16 %v212, %v211
    %v243 = vpack.c.b16 %v214, %v213
    %v244 = vpack.c.b16 %v216, %v215
    %v245 = vpack.c.b16 %v218, %v217
    %v246 = vpack.c.b16 %v220, %v219
    %v247 = vpack.c.b16 %v222, %v221
    %v248 = vpack.c.b16 %v224, %v223
    %v249 = vpack.c.b16 %v226, %v225
    %v250 = vpack.c.b16 %v228, %v227
    %v251 = vpack.c.b16 %v230, %v229
    %v252 = vpack.c.b16 %v232, %v231
    %v253 = vpack.c.b16 %v234, %v233
    %v254 = vpack.c.b16 %v236, %v235
    %v255 = vpack.c.b16 %v238, %v237
    %v256 = vpack.c.b16 %v240, %v239
    %273 = vmatprep.subr.bf16.mxu0 0
    %274 = vmatpush1.bf16.msra.mxu0 %v241
    %275 = vmatprep.subr.bf16.mxu0 0
    %276 = vmatpush1.bf16.msra.mxu0 %v242
    %277 = vmatprep.subr.bf16.mxu0 0
    %278 = vmatpush1.bf16.msra.mxu0 %v243
    %279 = vmatprep.subr.bf16.mxu0 0
    %280 = vmatpush1.bf16.msra.mxu0 %v244
    %281 = vmatprep.subr.bf16.mxu0 0
    %282 = vmatpush1.bf16.msra.mxu0 %v245
    %283 = vmatprep.subr.bf16.mxu0 0
    %284 = vmatpush1.bf16.msra.mxu0 %v246
    %285 = vmatprep.subr.bf16.mxu0 0
    %286 = vmatpush1.bf16.msra.mxu0 %v247
    %287 = vmatprep.subr.bf16.mxu0 0
    %288 = vmatpush1.bf16.msra.mxu0 %v248
    %289 = vmatprep.subr.bf16.mxu0 0
    %290 = vmatpush1.bf16.msra.mxu0 %v249
    %291 = vmatprep.subr.bf16.mxu0 0
    %292 = vmatpush1.bf16.msra.mxu0 %v250
    %293 = vmatprep.subr.bf16.mxu0 0
    %294 = vmatpush1.bf16.msra.mxu0 %v251
    %295 = vmatprep.subr.bf16.mxu0 0
    %296 = vmatpush1.bf16.msra.mxu0 %v252
    %297 = vmatprep.subr.bf16.mxu0 0
    %298 = vmatpush1.bf16.msra.mxu0 %v253
    %299 = vmatprep.subr.bf16.mxu0 0
    %300 = vmatpush1.bf16.msra.mxu0 %v254
    %301 = vmatprep.subr.bf16.mxu0 0
    %302 = vmatpush1.bf16.msra.mxu0 %v255
    %303 = vmatprep.subr.bf16.mxu0 0
    %304 = vmatpush1.bf16.msra.mxu0 %v256
    %305 = vmatprep.mubr.bf16.mxu0 %v137
    %306 = vmatmul.mubr.bf16.gmra.mrb[0].mxu0 %v136
    %v307 = vpop.f32.mrb[0].mxu0
    %v308 = vadd.f32 %v175, %v307
    %v309 = vpop.f32.mrb[0].mxu0
    %v310 = vpop.f32.mrb[0].mxu0
    %v311 = vadd.f32 %v175, %v310
    %v312 = vpop.f32.mrb[0].mxu0
    %313 = vdwg.mxu0
    %314 = vst [vmem:[%s4] sm:$0xff] %v308
    %315 = vst [vmem:[%s4 + $0x8] sm:$0xff] %v311
    // Predicated region
    $region26: #{_forward_impl.1} parent=1 // pred_check
      _
    $region27: #{_forward_impl.1} parent=1 // pred_check_branch
      %317 = sbr.rel (0) target = $region29
    $region28: #{_forward_impl.1} parent=1 // pred_region
      _
    $region29: #{_forward_impl.1} parent=1 // pred_fallthru
      _
    // Predicated region
    $region30: #{_forward_impl.1} parent=1 // pred_check
      _
    $region31: #{_forward_impl.1} parent=1 // pred_check_branch
      %319 = sbr.rel (0) target = $region33
    $region32: #{_forward_impl.1} parent=1 // pred_region
      _
    $region33: #{_forward_impl.1} parent=1 // pred_fallthru
      _
    %320 = vsyncpa [#allocation3], 1
    %321 = vsyncpa [#allocation5], 1

</llo_original>
